<compile_context>
chip_gen: v7x
topology: tpu7x:2x2x1
jax: 0.10.0
libtpu: 0.0.40
codegen_flags: <defaults>
</compile_context>

<pallas_src>
import functools

import numpy as np

import jax
import jax.numpy as jnp
from jax import lax
from jax.experimental import pallas as pl
from jax.experimental.pallas import tpu as pltpu


# --------------------------------------------------------------------------- #
# Stage 1: per-batch masked weight maps (one-hot gather on the MXU)           #
# --------------------------------------------------------------------------- #
def _wmap_prep_kernel(bank_ref, bkt_ref, mask_ref, wmap_ref, *, K, mxu_dtype):
    """wmap[t, p] = bank[t, buckets[p]] * tap_mask[t, p]  for one pixel chunk.

    bank_ref : VMEM (T, K)   f32   per-batch kernel bank, taps-major
    bkt_ref  : VMEM (1, pc)  int32 flattened bucket ids for this pixel chunk
    mask_ref : VMEM (T, pc)  f32   per-tap validity (zero-pad + lane-pad)
    wmap_ref : VMEM (T, pc)  f32   output: masked per-pixel weights
    """
    bkt = bkt_ref[...]                                        # (1, pc)
    pc = bkt.shape[1]
    k_iota = lax.broadcasted_iota(jnp.int32, (K, pc), 0)
    one_hot = (k_iota == bkt).astype(mxu_dtype)               # exact 0/1
    bank = bank_ref[...].astype(mxu_dtype)                    # (T, K)
    wmap = jnp.dot(bank, one_hot, preferred_element_type=jnp.float32)
    wmap_ref[...] = (wmap * mask_ref[...]).astype(wmap_ref.dtype)


# --------------------------------------------------------------------------- #
# Stage 2: channel-tiled bucketed convolution                                 #
# --------------------------------------------------------------------------- #
def _cs_conv_kernel(wmap_ref, x_ref, out_ref, *, W, KS, Pp, compute_dtype):
    """One (batch, channel-tile) block per grid step.

    wmap_ref : VMEM (T, Pp)  f32   per-batch masked weight maps
    x_ref    : VMEM (Cb, Pp)       input block, pixels flattened (lane-dense)
    out_ref  : VMEM (Cb, Pp)
    """
    pad = (KS - 1) // 2
    x_blk = x_ref[...].astype(compute_dtype)                  # (Cb, Pp)
    wmap = wmap_ref[...].astype(compute_dtype)                # (T, Pp)

    # Two alternating accumulators -> fewer acc read-modify-writes per bundle
    # (relieves the single vector-store slot on v5e).
    acc0 = jnp.zeros(x_blk.shape, jnp.float32)
    acc1 = jnp.zeros(x_blk.shape, jnp.float32)

    t = 0
    for i in range(KS):
        for j in range(KS):
            # Tap shift in flat pixel space -> circular lane rotation (XLU slot,
            # overlaps the VPU MACs).  Wrapped / out-of-image positions carry
            # zero weight (folded into wmap by the prep kernel).
            d = (i - pad) * W + (j - pad)
            shift = (-d) % Pp
            x_t = pltpu.roll(x_blk, shift, axis=1) if shift != 0 else x_blk
            contrib = (x_t * wmap[t:t + 1, :]).astype(jnp.float32)
            if t % 2 == 0:
                acc0 = acc0 + contrib
            else:
                acc1 = acc1 + contrib
            t += 1

    out_ref[...] = (acc0 + acc1).astype(out_ref.dtype)


# --------------------------------------------------------------------------- #
# Host-side helpers                                                            #
# --------------------------------------------------------------------------- #
def _default_compute_dtype():
    """bf16 on chips with a bf16 VPU (v6e / v7x), f32 otherwise (e.g. v5e)."""
    try:
        kind = jax.devices()[0].device_kind.lower()
    except Exception:
        return jnp.float32
    if ("v6" in kind) or ("v7" in kind):
        return jnp.bfloat16
    return jnp.float32


def _vmem_capacity_bytes():
    try:
        return int(pltpu.get_tpu_info().vmem_capacity_bytes)
    except Exception:
        return 64 << 20  # conservative (v7x per-TC) fallback


def _pick_pixel_chunk(P_pad, max_pc=8192):
    """Largest 128-multiple divisor of P_pad that is <= max_pc (bounds the
    (K, chunk) one-hot temporary in the prep kernel)."""
    if P_pad <= max_pc:
        return P_pad
    n128 = P_pad // 128
    best = 1
    for m in range(1, n128 + 1):
        if n128 % m == 0 and 128 * m <= max_pc:
            best = m
    return 128 * best


def _choose_block_c(C, max_cb):
    """Returns (block_c, C_pad).  block_c is a multiple of 8 (or == C);
    channels are zero-padded to C_pad when no clean divisor exists."""
    if max_cb >= C:
        return C, C
    cb = (max_cb // 8) * 8
    while cb >= 8:
        if C % cb == 0:
            return cb, C
        cb -= 8
    cb = max(8, (max_cb // 8) * 8)
    C_pad = ((C + cb - 1) // cb) * cb
    return cb, C_pad


def cs_conv2d(x, kernel_bank, buckets, kernel_size, *,
              compute_dtype=None, block_c=None):
    """Forward pass of CSConv2D.

    x           : (B, C, H, W) float32
    kernel_bank : (B, K, ks, ks) float32
    buckets     : (B, H, W) integer, values in [0, K)
    returns     : (B, C, H, W), dtype of x
    """
    assert kernel_size % 2 == 1
    B, C, H, W = x.shape
    Bk, K, ks1, ks2 = kernel_bank.shape
    assert Bk == B and ks1 == kernel_size and ks2 == kernel_size
    assert buckets.shape == (B, H, W)

    T = kernel_size * kernel_size
    pad = (kernel_size - 1) // 2
    P = H * W
    P_pad = ((P + 127) // 128) * 128          # lane-dense, unmasked stores
    out_dtype = x.dtype

    if compute_dtype is None:
        compute_dtype = _default_compute_dtype()

    # ---- host-side layout plumbing (free reshapes + zero lane padding) ------
    x_flat = x.reshape(B, C, P)
    bkt_flat = buckets.reshape(B, 1, P).astype(jnp.int32)
    if P_pad != P:
        x_flat = jnp.pad(x_flat, ((0, 0), (0, 0), (0, P_pad - P)))
        bkt_flat = jnp.pad(bkt_flat, ((0, 0), (0, 0), (0, P_pad - P)))
    bank_tk = kernel_bank.reshape(B, K, T).transpose(0, 2, 1).astype(jnp.float32)

    # Static per-tap validity mask: folds the conv zero-padding and the lane
    # padding into the weight maps (computed once, on the host, in numpy).
    rows = np.arange(P) // W
    cols = np.arange(P) % W
    tap_mask = np.zeros((T, P_pad), np.float32)
    for i in range(kernel_size):
        for j in range(kernel_size):
            t = i * kernel_size + j
            ok = ((rows + i - pad >= 0) & (rows + i - pad < H) &
                  (cols + j - pad >= 0) & (cols + j - pad < W))
            tap_mask[t, :P] = ok.astype(np.float32)
    tap_mask = jnp.asarray(tap_mask)

    # ---- stage 1: per-batch masked weight maps (B, T, P_pad) ----------------
    pc = _pick_pixel_chunk(P_pad)
    n_pc = P_pad // pc
    wmap = pl.pallas_call(
        functools.partial(_wmap_prep_kernel, K=K, mxu_dtype=compute_dtype),
        out_shape=jax.ShapeDtypeStruct((B, T, P_pad), jnp.float32),
        grid=(B, n_pc),
        in_specs=[
            pl.BlockSpec((None, T, K), lambda b, c: (b, 0, 0)),
            pl.BlockSpec((None, 1, pc), lambda b, c: (b, 0, c)),
            pl.BlockSpec((T, pc), lambda b, c: (0, c)),
        ],
        out_specs=pl.BlockSpec((None, T, pc), lambda b, c: (b, 0, c)),
        compiler_params=pltpu.CompilerParams(
            dimension_semantics=("parallel", "parallel")),
    )(bank_tk, bkt_flat, tap_mask)

    # ---- VMEM-capacity-aware channel tiling ----------------------------------
    cap = _vmem_capacity_bytes()
    esz_x = jnp.dtype(x.dtype).itemsize
    esz_o = jnp.dtype(out_dtype).itemsize
    esz_c = jnp.dtype(compute_dtype).itemsize
    # double-buffered in/out blocks + live (Cb, Pp) temporaries
    # (x cast + roll temp in compute dtype, product + two f32 accumulators)
    per_cb = P_pad * (2 * esz_x + 2 * esz_o + 2 * esz_c + 3 * 4)
    fixed = P_pad * T * (2 * 4 + esz_c) + (2 << 20)   # wmap dbuf + cast + misc
    budget = int(0.75 * cap) - fixed - (8 << 20)
    if budget < per_cb:
        # TODO(synk): add H-row tiling (row-slab P tiles with a halo) so huge
        # images fit in VMEM on v7x; for now fail loudly instead of clamping.
        raise ValueError(
            f"cs_conv2d: image too large for channel-only tiling "
            f"(P_pad={P_pad}, vmem capacity={cap} bytes)")

    if block_c is None:
        block_c, C_pad = _choose_block_c(C, budget // per_cb)
    else:
        assert C % block_c == 0
        C_pad = C
    need = fixed + block_c * per_cb
    if need > int(0.85 * cap):
        raise ValueError(
            f"cs_conv2d: chosen tiling needs {need} bytes of VMEM, exceeding "
            f"85% of capacity ({cap} bytes); reduce block_c or image size. "
            f"# TODO(synk): row tiling")
    vmem_limit = int(min(max(need + (8 << 20), 32 << 20), int(0.85 * cap)))

    if C_pad != C:
        x_flat = jnp.pad(x_flat, ((0, 0), (0, C_pad - C), (0, 0)))
    n_ct = C_pad // block_c

    # ---- stage 2: the convolution itself -------------------------------------
    out_flat = pl.pallas_call(
        functools.partial(_cs_conv_kernel, W=W, KS=kernel_size, Pp=P_pad,
                          compute_dtype=compute_dtype),
        out_shape=jax.ShapeDtypeStruct((B, C_pad, P_pad), out_dtype),
        grid=(B, n_ct),
        in_specs=[
            # per-batch weight maps: block index constant across the c axis,
            # so Pallas does not re-DMA (or recompute) them per channel tile.
            pl.BlockSpec((None, T, P_pad), lambda b, c: (b, 0, 0)),
            pl.BlockSpec((None, block_c, P_pad), lambda b, c: (b, c, 0)),
        ],
        out_specs=pl.BlockSpec((None, block_c, P_pad), lambda b, c: (b, c, 0)),
        compiler_params=pltpu.CompilerParams(
            dimension_semantics=("parallel", "parallel"),
            vmem_limit_bytes=vmem_limit,
        ),
    )(wmap, x_flat)

    return out_flat[:, :C, :P].reshape(B, C, H, W)


# --------------------------------------------------------------------------- #
# Self-test                                                                    #
# --------------------------------------------------------------------------- #
def _reference(x, kernel_bank, buckets, ks):
    B, C, H, W = x.shape
    pad = (ks - 1) // 2
    xp = jnp.pad(x, ((0, 0), (0, 0), (pad, pad), (pad, pad)))
    pk = kernel_bank[jnp.arange(B)[:, None, None], buckets]       # (B,H,W,ks,ks)
    patches = jnp.stack(
        [xp[:, :, i:i + H, j:j + W] for i in range(ks) for j in range(ks)],
        axis=-1)                                                  # (B,C,H,W,T)
    return jnp.einsum("bchwt,bhwt->bchw", patches,
                      pk.reshape(B, H, W, ks * ks),
                      precision=lax.Precision.HIGHEST)


if __name__ == "__main__":
    key = jax.random.PRNGKey(0)
    k1, k2, k3, k4, k5, k6 = jax.random.split(key, 6)

    # Case 1: lane-aligned image (P = 256), exact f32 check.
    B, C, H, W, KS, K = 2, 4, 16, 16, 3, 8
    x = jax.random.normal(k1, (B, C, H, W), dtype=jnp.float32)
    bank = jax.random.normal(k2, (B, K, KS, KS), dtype=jnp.float32)
    bkt = jax.random.randint(k3, (B, H, W), 0, K, dtype=jnp.int32)

    out = jax.block_until_ready(
        cs_conv2d(x, bank, bkt, KS, compute_dtype=jnp.float32))
    ref = _reference(x, bank, bkt, KS)
    assert out.shape == (B, C, H, W)
    assert jnp.allclose(out, ref, atol=1e-4, rtol=1e-4), "f32 mismatch (case 1)"

    # Case 1b: device-default compute dtype (bf16 on v6e/v7x, f32 elsewhere);
    # loose tolerance covers bf16 MAC rounding with f32 accumulation.
    out_auto = jax.block_until_ready(cs_conv2d(x, bank, bkt, KS))
    assert jnp.allclose(out_auto, ref, atol=1e-1, rtol=1e-1), \
        "auto-compute-dtype mismatch (case 1b)"

    # Case 2: non-128-multiple pixel count (P = 196 -> lane-padded to 256),
    # 5x5 taps, exact f32 check — exercises the padding / mask path.
    B2, C2, H2, W2, KS2, K2 = 2, 3, 14, 14, 5, 6
    x2 = jax.random.normal(k4, (B2, C2, H2, W2), dtype=jnp.float32)
    bank2 = jax.random.normal(k5, (B2, K2, KS2, KS2), dtype=jnp.float32)
    bkt2 = jax.random.randint(k6, (B2, H2, W2), 0, K2, dtype=jnp.int32)

    out2 = jax.block_until_ready(
        cs_conv2d(x2, bank2, bkt2, KS2, compute_dtype=jnp.float32))
    ref2 = _reference(x2, bank2, bkt2, KS2)
    assert out2.shape == (B2, C2, H2, W2)
    assert jnp.allclose(out2, ref2, atol=1e-4, rtol=1e-4), "f32 mismatch (case 2)"

    print("KERNEL_OK")
</pallas_src>

<mosaic_0001>
module attributes {stable_mosaic.version = 11 : i64} {
  func.func @_wmap_prep_kernel(%arg0: i32, %arg1: i32, %arg2: memref<1x9x8xf32, #tpu.memory_space<vmem>>, %arg3: memref<1x1x256xi32, #tpu.memory_space<vmem>>, %arg4: memref<9x256xf32, #tpu.memory_space<vmem>>, %arg5: memref<1x9x256xf32, #tpu.memory_space<vmem>>) attributes {dimension_semantics = [#tpu.dimension_semantics<parallel>, #tpu.dimension_semantics<parallel>], iteration_bounds = array<i64: 2, 1>, scalar_prefetch = 0 : i64, scratch_operands = 0 : i64, tpu.core_type = #tpu.core_type<tc>, window_params = [{transform_indices = @transform_0, window_bounds = array<i64: 1, 9, 8>}, {transform_indices = @transform_1, window_bounds = array<i64: 1, 1, 256>}, {transform_indices = @transform_2, window_bounds = array<i64: 9, 256>}, {transform_indices = @transform_3, window_bounds = array<i64: 1, 9, 256>}]} {
    %c0 = arith.constant 0 : index
    %c0_0 = arith.constant 0 : index
    %c0_1 = arith.constant 0 : index
    %0 = vector.load %arg3[%c0, %c0_0, %c0_1] : memref<1x1x256xi32, #tpu.memory_space<vmem>>, vector<1x1x256xi32>
    %1 = vector.shape_cast %0 : vector<1x1x256xi32> to vector<1x256xi32>
    %2 = tpu.iota {dimensions = array<i32: 0>} : vector<8x256xi32>
    %3 = vector.broadcast %1 : vector<1x256xi32> to vector<8x256xi32>
    %4 = arith.cmpi eq, %2, %3 : vector<8x256xi32>
    %5 = arith.extui %4 : vector<8x256xi1> to vector<8x256xi32>
    %6 = arith.sitofp %5 : vector<8x256xi32> to vector<8x256xf32>
    %c0_2 = arith.constant 0 : index
    %c0_3 = arith.constant 0 : index
    %c0_4 = arith.constant 0 : index
    %7 = vector.load %arg2[%c0_2, %c0_3, %c0_4] : memref<1x9x8xf32, #tpu.memory_space<vmem>>, vector<1x9x8xf32>
    %8 = vector.shape_cast %7 : vector<1x9x8xf32> to vector<9x8xf32>
    %cst = arith.constant dense<0.000000e+00> : vector<9x256xf32>
    %9 = tpu.matmul %8, %6, %cst {dimension_numbers = #tpu.dot_dimension_numbers<[1], [0], [0], [1], [0, 0, 1, 1], [], []>} : vector<9x8xf32>, vector<8x256xf32>, vector<9x256xf32> -> vector<9x256xf32>
    %c0_5 = arith.constant 0 : index
    %c0_6 = arith.constant 0 : index
    %10 = vector.load %arg4[%c0_5, %c0_6] : memref<9x256xf32, #tpu.memory_space<vmem>>, vector<9x256xf32>
    %11 = arith.mulf %9, %10 : vector<9x256xf32>
    %c0_7 = arith.constant 0 : index
    %c0_8 = arith.constant 0 : index
    %c0_9 = arith.constant 0 : index
    %12 = vector.load %arg5[%c0_7, %c0_8, %c0_9] : memref<1x9x256xf32, #tpu.memory_space<vmem>>, vector<1x9x256xf32>
    %13 = vector.shape_cast %12 : vector<1x9x256xf32> to vector<9x256xf32>
    %14 = vector.shape_cast %11 : vector<9x256xf32> to vector<1x9x256xf32>
    tpu.vector_store %arg5[%c0_7, %c0_8, %c0_9], %14 {strides = array<i32>} : memref<1x9x256xf32, #tpu.memory_space<vmem>>, vector<1x9x256xf32>,
    return
  }
  func.func @transform_0(%arg0: i32, %arg1: i32) -> (i32, i32, i32) {
    %c0_i32 = arith.constant 0 : i32
    %c0_i32_0 = arith.constant 0 : i32
    %c0_i32_1 = arith.constant 0 : i32
    return %arg0, %c0_i32, %c0_i32_0 : i32, i32, i32
  }
  func.func @transform_1(%arg0: i32, %arg1: i32) -> (i32, i32, i32) {
    %c0_i32 = arith.constant 0 : i32
    %c0_i32_0 = arith.constant 0 : i32
    return %arg0, %c0_i32, %arg1 : i32, i32, i32
  }
  func.func @transform_2(%arg0: i32, %arg1: i32) -> (i32, i32) {
    %c0_i32 = arith.constant 0 : i32
    %c0_i32_0 = arith.constant 0 : i32
    return %c0_i32, %arg1 : i32, i32
  }
  func.func @transform_3(%arg0: i32, %arg1: i32) -> (i32, i32, i32) {
    %c0_i32 = arith.constant 0 : i32
    %c0_i32_0 = arith.constant 0 : i32
    return %arg0, %c0_i32, %arg1 : i32, i32, i32
  }
}

</mosaic_0001>

<llo_original>
// kernel: tpu_custom_call.1
$region0: #{tpu_custom_call.1}
  #allocation0 [shape = 'u32[]', space=smem, size = 0x4, offset = 0x4, fixed_abs, tag = 'smem constant byte address 0x4 - core index']
  #allocation1 [shape = 'u32[144,128]{1,0:T(1,128)}', space=vmem, size = 0x12000, scoped, tag = 'internal scratch']
  %s0 = inlined_call_operand.vmem [shape: f32[2,9,8], index: 0, kind: input, shape index: {}]
  %s1 = inlined_call_operand.vmem [shape: s32[2,1,256], index: 1, kind: input, shape index: {}]
  %s2 = inlined_call_operand.vmem [shape: f32[9,256], index: 2, kind: input, shape index: {}]
  %s3 = inlined_call_operand.vmem [shape: f32[2,9,256], index: 3, kind: output, shape index: {}]
  %s4 = sld [smem:[#allocation0]]
  $region45: #{tpu_custom_call.1} parent=0
    _
  %s6 = ssub.s32 1, %s4
  %s7 = scalar_select 0, %s6, %s4
  loop: start=0, step=1, limit=4
  $region2: #{tpu_custom_call.1} parent=0 // loop_pre_header
    _
  $region3: #{tpu_custom_call.1} parent=0 // loop_header
    %s9 = sphi 0, %s13
    %p10 = scmp.ge.s32.totalorder %s9, 4
    %s16 = sphi 0, %s28
    %s17 = sphi 0, %s24
    %s18 = sphi 0, %s16
    %s19 = sphi 0, %s17
    %s20 = sphi 0, %s18
    %s21 = sphi 0, %s19
    %s31 = sphi 0, %s33
    %s34 = sphi 0, %s31
    %s35 = sphi 0, %s34
    %s51 = sphi 0, %s35
    %s59 = sphi 0, %s61
    %s62 = sphi 0, %s59
    %s63 = sphi 0, %s62
    %s79 = sphi 0, %s63
    %s85 = sphi 0, %s87
    %s88 = sphi 0, %s85
    %s89 = sphi 0, %s88
    %s105 = sphi 0, %s89
    %s113 = sphi 0, %s115
    %s116 = sphi 0, %s113
    %s117 = sphi 0, %s116
    %s133 = sphi 0, %s117
  $region4: #{tpu_custom_call.1} parent=0 // loop_header_branch
    %12 = sbr.rel (%p10) target = $region8
  $region5: #{tpu_custom_call.1} parent=0 // loop_body
    %s14 = ssub.s32 %s9, 1
    %s15 = ssub.s32 %s9, 2
    %s22 = sadd.s32 1, %s17
    %p23 = scmp.ge.s32.totalorder %s22, 1
    %s24 = scalar_select %p23, 0, %s22
    %s25 = sadd.s32 1, %s16
    %s26 = scalar_select %p23, %s25, %s16
    %p27 = scmp.ge.s32.totalorder %s26, 2
    %s28 = scalar_select %p27, 0, %s26
    %s29 = ssub.s32 %s16, %s28
    %p30 = scmp.eq.s32.totalorder %s29, 0
    %s32 = sadd.s32 %s31, 1
    %s33 = scalar_select %p30, %s31, %s32
    %p36 = pneg %p30
    %p37 = scmp.eq.s32.totalorder %s9, 1
    %p38 = por %p36, %p37
    %p39 = scmp.ne.s32.totalorder %s31, %s34
    %p40 = scmp.eq.s32.totalorder %s9, 0
    %p41 = por %p39, %p40
    %p42 = scmp.ne.s32.totalorder %s31, %s34
    %p43 = scmp.eq.s32.totalorder %s14, 1
    %p44 = por %p42, %p43
    %p45 = scmp.ne.s32.totalorder %s34, %s35
    %p46 = scmp.eq.s32.totalorder %s14, 0
    %p47 = por %p45, %p46
    %p48 = scmp.ne.s32.totalorder %s34, %s35
    %p49 = scmp.eq.s32.totalorder %s15, 1
    %p50 = por %p48, %p49
    %p52 = scmp.ne.s32.totalorder %s35, %s51
    %p53 = scmp.eq.s32.totalorder %s15, 0
    %p54 = por %p52, %p53
    %s55 = ssub.s32 %s16, %s28
    %s56 = ssub.s32 %s17, %s24
    %s57 = sor.u32 %s55, %s56
    %p58 = scmp.eq.s32.totalorder %s57, 0
    %s60 = sadd.s32 %s59, 1
    %s61 = scalar_select %p58, %s59, %s60
    %p64 = pneg %p58
    %p65 = scmp.eq.s32.totalorder %s9, 1
    %p66 = por %p64, %p65
    %p67 = scmp.ne.s32.totalorder %s59, %s62
    %p68 = scmp.eq.s32.totalorder %s9, 0
    %p69 = por %p67, %p68
    %p70 = scmp.ne.s32.totalorder %s59, %s62
    %p71 = scmp.eq.s32.totalorder %s14, 1
    %p72 = por %p70, %p71
    %p73 = scmp.ne.s32.totalorder %s62, %s63
    %p74 = scmp.eq.s32.totalorder %s14, 0
    %p75 = por %p73, %p74
    %p76 = scmp.ne.s32.totalorder %s62, %s63
    %p77 = scmp.eq.s32.totalorder %s15, 1
    %p78 = por %p76, %p77
    %p80 = scmp.ne.s32.totalorder %s63, %s79
    %p81 = scmp.eq.s32.totalorder %s15, 0
    %p82 = por %p80, %p81
    %s83 = ssub.s32 %s17, %s24
    %p84 = scmp.eq.s32.totalorder %s83, 0
    %s86 = sadd.s32 %s85, 1
    %s87 = scalar_select %p84, %s85, %s86
    %p90 = pneg %p84
    %p91 = scmp.eq.s32.totalorder %s9, 1
    %p92 = por %p90, %p91
    %p93 = scmp.ne.s32.totalorder %s85, %s88
    %p94 = scmp.eq.s32.totalorder %s9, 0
    %p95 = por %p93, %p94
    %p96 = scmp.ne.s32.totalorder %s85, %s88
    %p97 = scmp.eq.s32.totalorder %s14, 1
    %p98 = por %p96, %p97
    %p99 = scmp.ne.s32.totalorder %s88, %s89
    %p100 = scmp.eq.s32.totalorder %s14, 0
    %p101 = por %p99, %p100
    %p102 = scmp.ne.s32.totalorder %s88, %s89
    %p103 = scmp.eq.s32.totalorder %s15, 1
    %p104 = por %p102, %p103
    %p106 = scmp.ne.s32.totalorder %s89, %s105
    %p107 = scmp.eq.s32.totalorder %s15, 0
    %p108 = por %p106, %p107
    %s109 = ssub.s32 %s16, %s28
    %s110 = ssub.s32 %s17, %s24
    %s111 = sor.u32 %s109, %s110
    %p112 = scmp.eq.s32.totalorder %s111, 0
    %s114 = sadd.s32 %s113, 1
    %s115 = scalar_select %p112, %s113, %s114
    %p118 = pneg %p112
    %p119 = scmp.eq.s32.totalorder %s9, 1
    %p120 = por %p118, %p119
    %p121 = scmp.ne.s32.totalorder %s113, %s116
    %p122 = scmp.eq.s32.totalorder %s9, 0
    %p123 = por %p121, %p122
    %p124 = scmp.ne.s32.totalorder %s113, %s116
    %p125 = scmp.eq.s32.totalorder %s14, 1
    %p126 = por %p124, %p125
    %p127 = scmp.ne.s32.totalorder %s116, %s117
    %p128 = scmp.eq.s32.totalorder %s14, 0
    %p129 = por %p127, %p128
    %p130 = scmp.ne.s32.totalorder %s116, %s117
    %p131 = scmp.eq.s32.totalorder %s15, 1
    %p132 = por %p130, %p131
    %p134 = scmp.ne.s32.totalorder %s117, %s133
    %p135 = scmp.eq.s32.totalorder %s15, 0
    %p136 = por %p134, %p135
    %p137 = scmp.le.s32.totalorder 1, %s9
    %p138 = scmp.lt.s32.totalorder %s9, 3
    %p139 = pnand %p137, %p138
    %p140 = pneg %p139
    // Predicated region
    $region9: #{tpu_custom_call.1} parent=5 // pred_check
      _
    $region10: #{tpu_custom_call.1} parent=5 // pred_check_branch
      %142 = sbr.rel (%p139) target = $region12
    $region11: #{tpu_custom_call.1} parent=5 // pred_region
      %s143 = ssub.s32 %s9, 1
      // Predicated region
      $region13: #{tpu_custom_call.1} parent=11 // pred_check
        %p144 = pneg %p101
      $region14: #{tpu_custom_call.1} parent=11 // pred_check_branch
        %146 = sbr.rel (%p144) target = $region16
      $region15: #{tpu_custom_call.1} parent=11 // pred_region
        %s147 = smul.u32 2, %s19
        %p148 = scmp.lt.s32.totalorder %s147, 1
        %s149 = scalar_select %p148, %s147, 1
        %s150 = smul.addr %s149, 8
        %s151 = scalar_lea.vmem %s2, %s150
        %s152 = smul.u32 2, %s19
      $region16: #{tpu_custom_call.1} parent=11 // pred_fallthru
        _
    $region12: #{tpu_custom_call.1} parent=5 // pred_fallthru
      _
    %p153 = scmp.lt.s32.totalorder %s9, 2
    // Predicated region
    $region17: #{tpu_custom_call.1} parent=5 // pred_check
      %p154 = pneg %p153
    $region18: #{tpu_custom_call.1} parent=5 // pred_check_branch
      %156 = sbr.rel (%p154) target = $region20
    $region19: #{tpu_custom_call.1} parent=5 // pred_region
      // Predicated region
      $region21: #{tpu_custom_call.1} parent=19 // pred_check
        %p157 = pneg %p41
      $region22: #{tpu_custom_call.1} parent=19 // pred_check_branch
        %159 = sbr.rel (%p157) target = $region24
      $region23: #{tpu_custom_call.1} parent=19 // pred_region
        %p160 = scmp.lt.s32.totalorder %s16, 1
        %s161 = scalar_select %p160, %s16, 1
        %s162 = smul.addr %s161, 2
        %s163 = smul.addr %s162, 8
        %s164 = scalar_lea.vmem %s0, %s163
      $region24: #{tpu_custom_call.1} parent=19 // pred_fallthru
        _
      // Predicated region
      $region25: #{tpu_custom_call.1} parent=19 // pred_check
        %p165 = pneg %p69
      $region26: #{tpu_custom_call.1} parent=19 // pred_check_branch
        %167 = sbr.rel (%p165) target = $region28
      $region27: #{tpu_custom_call.1} parent=19 // pred_region
        %s168 = smul.u32 2, %s17
        %p169 = scmp.lt.s32.totalorder %s16, 1
        %s170 = scalar_select %p169, %s16, 1
        %p171 = scmp.lt.s32.totalorder %s168, 1
        %s172 = scalar_select %p171, %s168, 1
        %s173 = smul.addr %s170, 2
        %s174 = sadd.s32 %s172, %s173
        %s175 = scalar_lea.vmem %s1, %s174
        %s176 = smul.u32 2, %s17
      $region28: #{tpu_custom_call.1} parent=19 // pred_fallthru
        _
    $region20: #{tpu_custom_call.1} parent=5 // pred_fallthru
      _
    %p177 = scmp.le.s32.totalorder 1, %s9
    %p178 = scmp.lt.s32.totalorder %s9, 3
    %p179 = pnand %p177, %p178
    %p180 = pneg %p179
    // Predicated region
    $region29: #{tpu_custom_call.1} parent=5 // pred_check
      _
    $region30: #{tpu_custom_call.1} parent=5 // pred_check_branch
      %182 = sbr.rel (%p179) target = $region32
    $region31: #{tpu_custom_call.1} parent=5 // pred_region
      %s183 = ssub.s32 %s9, 1
      %p184 = scmp.lt.s32.totalorder %s18, 1
      %s185 = scalar_select %p184, %s18, 1
      %s186 = smul.addr %s185, 2
      %s187 = smul.addr %s186, 8
      %s188 = scalar_lea.vmem %s0, %s187
      %p189 = pneg %p47
      %p190 = pneg %p44
      %s191 = smul.u32 2, %s19
      %p192 = scmp.lt.s32.totalorder %s18, 1
      %s193 = scalar_select %p192, %s18, 1
      %p194 = scmp.lt.s32.totalorder %s191, 1
      %s195 = scalar_select %p194, %s191, 1
      %s196 = smul.addr %s193, 2
      %s197 = sadd.s32 %s195, %s196
      %s198 = scalar_lea.vmem %s1, %s197
      %p199 = pneg %p75
      %p200 = pneg %p72
      %s201 = smul.u32 2, %s19
      %p202 = scmp.lt.s32.totalorder %s201, 1
      %s203 = scalar_select %p202, %s201, 1
      %s204 = smul.addr %s203, 8
      %s205 = scalar_lea.vmem %s2, %s204
      %p206 = pneg %p101
      %p207 = pneg %p98
      %p208 = pneg %p129
      %p209 = pneg %p126
      %s210 = smul.u32 2, %s19
      %p211 = scmp.lt.s32.totalorder %s18, 1
      %s212 = scalar_select %p211, %s18, 1
      %p213 = scmp.lt.s32.totalorder %s210, 1
      %s214 = scalar_select %p213, %s210, 1
      %s215 = smul.addr %s212, 4
      %s216 = sadd.s32 %s214, %s215
      %s217 = smul.addr %s216, 8
      %s218 = scalar_lea.vmem %s3, %s217
      %p219 = scmp.lt.s32.totalorder %s18, 1
      %s220 = scalar_select %p219, %s18, 1
      %s221 = smul.addr %s220, 2
      %s222 = smul.addr %s221, 8
      %s223 = scalar_lea.vmem %s0, %s222
      %s224 = smul.u32 2, %s19
      %p225 = scmp.lt.s32.totalorder %s18, 1
      %s226 = scalar_select %p225, %s18, 1
      %p227 = scmp.lt.s32.totalorder %s224, 1
      %s228 = scalar_select %p227, %s224, 1
      %s229 = smul.addr %s226, 2
      %s230 = sadd.s32 %s228, %s229
      %s231 = scalar_lea.vmem %s1, %s230
      %s232 = smul.u32 2, %s19
      %s233 = smul.u32 2, %s19
      %p234 = scmp.lt.s32.totalorder %s233, 1
      %s235 = scalar_select %p234, %s233, 1
      %s236 = smul.addr %s235, 8
      %s237 = scalar_lea.vmem %s2, %s236
      %s238 = smul.u32 2, %s19
      %s239 = smul.u32 2, %s19
      %p240 = scmp.lt.s32.totalorder %s18, 1
      %s241 = scalar_select %p240, %s18, 1
      %p242 = scmp.lt.s32.totalorder %s239, 1
      %s243 = scalar_select %p242, %s239, 1
      %s244 = smul.addr %s241, 4
      %s245 = sadd.s32 %s243, %s244
      %s246 = smul.addr %s245, 8
      %s247 = scalar_lea.vmem %s3, %s246
      %s248 = smul.u32 2, %s19
      %v249 = vld [vmem:[%s231] sm:$0x3]
      %v250 = vlaneseq
      %v251 = vshrl.u32 %v250, 7
      %v252 = vlaneseq
      %v253 = vshrl.u32 %v252, 7
      %v254 = vsub.s32 0, %v253
      %v255 = vrot.slane %v249, %v254
      %v256 = vlaneseq
      %v257 = vshrl.u32 %v256, 7
      %v258 = vsub.s32 1, %v257
      %v259 = vrot.slane %v249, %v258
      %vm260 = vcmp.eq.s32.totalorder %v251, %v255
      %vm261 = vcmp.eq.s32.totalorder %v251, %v259
      %v262 = vsel %vm260, 1, 0
      %v263 = vsel %vm261, 1, 0
      %v264 = vcvt.s32.f32 %v262
      %v265 = vcvt.s32.f32 %v263
      %v266 = vld [vmem:[%s223] sm:$0xff]
      %v267 = vld [vmem:[%s223 + $0x8] sm:$0x1]
      %vm268 = vcmask 64512
      %v270 = vsel %vm268, %v266, 0
      %v273 = vsel %vm268, %v267, 0
      %275 = vmatprep.subr.mxu0 %v265
      %276 = vmatpush1.msra.mxu0 %v264
      %277 = vmatprep.subr.mxu0 0.0
      %278 = vmatpush1.msra.mxu0 0.0
      %279 = vmatprep.subr.mxu0 0.0
      %280 = vmatpush1.msra.mxu0 0.0
      %281 = vmatprep.subr.mxu0 0.0
      %282 = vmatpush1.msra.mxu0 0.0
      %283 = vmatprep.subr.mxu0 0.0
      %284 = vmatpush1.msra.mxu0 0.0
      %285 = vmatprep.subr.mxu0 0.0
      %286 = vmatpush1.msra.mxu0 0.0
      %287 = vmatprep.subr.mxu0 0.0
      %288 = vmatpush1.msra.mxu0 0.0
      %289 = vmatprep.subr.mxu0 0.0
      %290 = vmatpush1.msra.mxu0 0.0
      %291 = vmatprep.subr.mxu0 0.0
      %292 = vmatpush1.msra.mxu0 0.0
      %293 = vmatprep.subr.mxu0 0.0
      %294 = vmatpush1.msra.mxu0 0.0
      %295 = vmatprep.subr.mxu0 0.0
      %296 = vmatpush1.msra.mxu0 0.0
      %297 = vmatprep.subr.mxu0 0.0
      %298 = vmatpush1.msra.mxu0 0.0
      %299 = vmatprep.subr.mxu0 0.0
      %300 = vmatpush1.msra.mxu0 0.0
      %301 = vmatprep.subr.mxu0 0.0
      %302 = vmatpush1.msra.mxu0 0.0
      %303 = vmatprep.subr.mxu0 0.0
      %304 = vmatpush1.msra.mxu0 0.0
      %305 = vmatprep.subr.mxu0 0.0
      %306 = vmatpush1.msra.mxu0 0.0
      %307 = vmatprep.subr.mxu0 0.0
      %308 = vmatpush1.msra.mxu0 0.0
      %309 = vmatprep.subr.mxu0 0.0
      %310 = vmatpush1.msra.mxu0 0.0
      %311 = vmatprep.subr.mxu0 0.0
      %312 = vmatpush1.msra.mxu0 0.0
      %313 = vmatprep.subr.mxu0 0.0
      %314 = vmatpush1.msra.mxu0 0.0
      %315 = vmatprep.subr.mxu0 0.0
      %316 = vmatpush1.msra.mxu0 0.0
      %317 = vmatprep.subr.mxu0 0.0
      %318 = vmatpush1.msra.mxu0 0.0
      %319 = vmatprep.subr.mxu0 0.0
      %320 = vmatpush1.msra.mxu0 0.0
      %321 = vmatprep.subr.mxu0 0.0
      %322 = vmatpush1.msra.mxu0 0.0
      %323 = vmatprep.subr.mxu0 0.0
      %324 = vmatpush1.msra.mxu0 0.0
      %325 = vmatprep.subr.mxu0 0.0
      %326 = vmatpush1.msra.mxu0 0.0
      %327 = vmatprep.subr.mxu0 0.0
      %328 = vmatpush1.msra.mxu0 0.0
      %329 = vmatprep.subr.mxu0 0.0
      %330 = vmatpush1.msra.mxu0 0.0
      %331 = vmatprep.subr.mxu0 0.0
      %332 = vmatpush1.msra.mxu0 0.0
      %333 = vmatprep.subr.mxu0 0.0
      %334 = vmatpush1.msra.mxu0 0.0
      %335 = vmatprep.subr.mxu0 0.0
      %336 = vmatpush1.msra.mxu0 0.0
      %337 = vmatprep.subr.mxu0 0.0
      %338 = vmatpush1.msra.mxu0 0.0
      %339 = vmatprep.mubr.f32.mxu0 0.0
      %340 = vmatmul.mubr.f32.gmra.mrb[0].mxu0 %v270
      %v341 = vpop.f32.mrb[0].mxu0
      %v342 = vadd.f32 0.0, %v341
      %v343 = vpop.f32.mrb[0].mxu0
      %v344 = vadd.f32 0.0, %v343
      %345 = vmatprep.mubr.f32.mxu0 0.0
      %346 = vmatmul.mubr.f32.gmra.mrb[0].mxu0 %v273
      %v347 = vpop.f32.mrb[0].mxu0
      %v348 = vadd.f32 0.0, %v347
      %v349 = vpop.f32.mrb[0].mxu0
      %v350 = vadd.f32 0.0, %v349
      %351 = vdwg.mxu0
      %v352 = vld [vmem:[%s237] sm:$0xff]
      %v353 = vld [vmem:[%s237 + $0x8] sm:$0xff]
      %v354 = vld [vmem:[%s237 + $0x10] sm:$0x1]
      %v355 = vld [vmem:[%s237 + $0x18] sm:$0x1]
      %v356 = vmul.f32 %v342, %v352
      %v357 = vmul.f32 %v344, %v353
      %v358 = vmul.f32 %v348, %v354
      %v359 = vmul.f32 %v350, %v355
      %360 = vst [vmem:[%s247] sm:$0xff] %v356
      %361 = vst [vmem:[%s247 + $0x8] sm:$0xff] %v357
      %362 = vst [vmem:[%s247 + $0x10] sm:$0x1] %v358
      %363 = vst [vmem:[%s247 + $0x18] sm:$0x1] %v359
      %s364 = smul.u32 2, %s19
      %p365 = scmp.lt.s32.totalorder %s18, 1
      %s366 = scalar_select %p365, %s18, 1
      %p367 = scmp.lt.s32.totalorder %s364, 1
      %s368 = scalar_select %p367, %s364, 1
      %s369 = smul.addr %s366, 4
      %s370 = sadd.s32 %s368, %s369
      %s371 = smul.addr %s370, 8
      %s372 = scalar_lea.vmem %s3, %s371
      // Predicated region
      $region33: #{tpu_custom_call.1} parent=31 // pred_check
        %p373 = pneg %p126
      $region34: #{tpu_custom_call.1} parent=31 // pred_check_branch
        %375 = sbr.rel (%p373) target = $region36
      $region35: #{tpu_custom_call.1} parent=31 // pred_region
        %s376 = smul.u32 2, %s19
      $region36: #{tpu_custom_call.1} parent=31 // pred_fallthru
        _
    $region32: #{tpu_custom_call.1} parent=5 // pred_fallthru
      _
    %p377 = scmp.le.s32.totalorder 2, %s9
    // Predicated region
    $region37: #{tpu_custom_call.1} parent=5 // pred_check
      %p378 = pneg %p377
    $region38: #{tpu_custom_call.1} parent=5 // pred_check_branch
      %380 = sbr.rel (%p378) target = $region40
    $region39: #{tpu_custom_call.1} parent=5 // pred_region
      %s381 = ssub.s32 %s9, 2
      // Predicated region
      $region41: #{tpu_custom_call.1} parent=39 // pred_check
        %p382 = pneg %p132
      $region42: #{tpu_custom_call.1} parent=39 // pred_check_branch
        %384 = sbr.rel (%p382) target = $region44
      $region43: #{tpu_custom_call.1} parent=39 // pred_region
        %s385 = smul.u32 2, %s21
        %p386 = scmp.lt.s32.totalorder %s20, 1
        %s387 = scalar_select %p386, %s20, 1
        %p388 = scmp.lt.s32.totalorder %s385, 1
        %s389 = scalar_select %p388, %s385, 1
        %s390 = smul.addr %s387, 4
        %s391 = sadd.s32 %s389, %s390
        %s392 = smul.addr %s391, 8
        %s393 = scalar_lea.vmem %s3, %s392
      $region44: #{tpu_custom_call.1} parent=39 // pred_fallthru
        _
    $region40: #{tpu_custom_call.1} parent=5 // pred_fallthru
      _
  $region6: #{tpu_custom_call.1} parent=0 // loop_footer
    %s13 = sadd.s32 1, %s9
  $region7: #{tpu_custom_call.1} parent=0 // loop_footer_branch
    %8 = sbr.rel target = $region3
  $region8: #{tpu_custom_call.1} parent=0 // loop_exit
    _

</llo_original>
